<compile_context>
chip_gen: v5e
topology: v5e:2x2
jax: 0.10.0
libtpu: 0.0.40
codegen_flags: <defaults>
</compile_context>

<pallas_src>
import functools

import jax
import jax.numpy as jnp
from jax.experimental import pallas as pl
from jax.experimental.pallas import tpu as pltpu


# ---------------------------------------------------------------------------
# Kernels
# ---------------------------------------------------------------------------
def _gcn_fused_kernel(x_ref, w1ti_ref, b1_ref, w2_ref, o_ref):
    """Whole batch in a single grid step (small B*S).

    x_ref/o_ref: (B*S, N); w1ti_ref: (N, N) = W1.T + I; b1_ref: (1, N);
    w2_ref: (S, S) shared across batches.
    """
    S = w2_ref.shape[0]
    B = x_ref.shape[0] // S

    x = x_ref[...]
    # conv1 over the node axis for the whole batch in one MXU dot; residual is
    # already folded into the weight (W1.T + I).
    h = jnp.dot(x, w1ti_ref[...], preferred_element_type=jnp.float32)
    h = jnp.maximum(h + b1_ref[...], 0.0)

    # conv2 over the state axis, per batch, sharing the same (S, S) W2
    # (B is static -> unrolled; no O(B^2) block-diagonal weight).
    w2 = w2_ref[...]
    for b in range(B):
        hb = h[b * S:(b + 1) * S, :]
        o_ref[pl.ds(b * S, S), :] = jnp.dot(
            w2, hb, preferred_element_type=jnp.float32).astype(o_ref.dtype)


def _gcn_batched_kernel(x_ref, w1ti_ref, b1_ref, w2_ref, o_ref):
    """One batch element per grid step; weights are grid-invariant/resident."""
    x = x_ref[...]                                             # (S, N)
    h = jnp.dot(x, w1ti_ref[...], preferred_element_type=jnp.float32)
    h = jnp.maximum(h + b1_ref[...], 0.0)
    o = jnp.dot(w2_ref[...], h, preferred_element_type=jnp.float32)
    o_ref[...] = o.astype(o_ref.dtype)


# ---------------------------------------------------------------------------
# Wrappers
# ---------------------------------------------------------------------------
def gcn_prepare_params(w1, b1, w2):
    """One-time, per-parameter-set preparation (hoisted out of the hot path)."""
    n = w1.shape[0]
    w1ti = w1.T + jnp.eye(n, dtype=w1.dtype)   # fold the residual into conv1
    b1r = b1.reshape(1, n)
    return w1ti, b1r, w2


@functools.partial(jax.jit, static_argnames=("batch_grid",))
def gcn_forward(x, w1ti, b1r, w2, batch_grid=None):
    """x: (B, S, N); w1ti: (N, N) = W1.T + I; b1r: (1, N); w2: (S, S)."""
    B, S, N = x.shape
    if batch_grid is None:
        # Crossover: a grid axis over B only pays once per-batch work exceeds
        # the ~0.35 us per-step overhead (and it engages v7x's 2nd TensorCore).
        batch_grid = (B > 1) and (B * S >= 1024)

    if not batch_grid:
        x2d = x.reshape(B * S, N)     # contiguous reshape: free under jit
        out = pl.pallas_call(
            _gcn_fused_kernel,
            out_shape=jax.ShapeDtypeStruct((B * S, N), x.dtype),
            grid_spec=pltpu.PrefetchScalarGridSpec(
                num_scalar_prefetch=0,
                grid=(1,),                                     # single fused step
                in_specs=[
                    pl.BlockSpec((B * S, N), lambda i: (0, 0)),  # x (rows = B*S)
                    pl.BlockSpec((N, N), lambda i: (0, 0)),      # W1.T + I
                    pl.BlockSpec((1, N), lambda i: (0, 0)),      # b1
                    pl.BlockSpec((S, S), lambda i: (0, 0)),      # W2 (shared)
                ],
                out_specs=pl.BlockSpec((B * S, N), lambda i: (0, 0)),
            ),
        )(x2d, w1ti, b1r, w2)
        return out.reshape(B, S, N)

    # Grid over batch: one (S, N) tile per step, shared weights, parallel
    # semantics so megacore (v7x) can split batches across TensorCores.
    return pl.pallas_call(
        _gcn_batched_kernel,
        out_shape=jax.ShapeDtypeStruct((B, S, N), x.dtype),
        grid_spec=pltpu.PrefetchScalarGridSpec(
            num_scalar_prefetch=0,
            grid=(B,),
            in_specs=[
                pl.BlockSpec((None, S, N), lambda b: (b, 0, 0)),  # x[b]
                pl.BlockSpec((N, N), lambda b: (0, 0)),
                pl.BlockSpec((1, N), lambda b: (0, 0)),
                pl.BlockSpec((S, S), lambda b: (0, 0)),
            ],
            out_specs=pl.BlockSpec((None, S, N), lambda b: (b, 0, 0)),
        ),
        compiler_params=pltpu.CompilerParams(
            dimension_semantics=("parallel",)),
    )(x, w1ti, b1r, w2)


def gcn_reference(x, w1, b1, w2):
    # Pure-JAX reference mirroring the PyTorch forward exactly.
    h = jnp.einsum("nm,bsm->bsn", w1, x) + b1[None, None, :]   # conv1 (node ch)
    h = jnp.maximum(h + x, 0.0)                                # residual + ReLU
    return jnp.einsum("st,btn->bsn", w2, h)                    # conv2 (state ch)


if __name__ == "__main__":
    B, num_state, num_node = 2, 32, 16   # x: (B, num_state, num_node)

    key = jax.random.PRNGKey(0)
    kx, kw1, kb1, kw2 = jax.random.split(key, 4)

    x = jax.random.normal(kx, (B, num_state, num_node), dtype=jnp.float32)
    # conv1: Conv1d(num_node, num_node, k=1) -> weight (N, N), bias (N,)
    w1 = jax.random.normal(kw1, (num_node, num_node), dtype=jnp.float32) * 0.1
    b1 = jax.random.normal(kb1, (num_node,), dtype=jnp.float32) * 0.1
    # conv2: Conv1d(num_state, num_state, k=1, bias=False) -> weight (S, S)
    w2 = jax.random.normal(kw2, (num_state, num_state), dtype=jnp.float32) * 0.1

    # One-time parameter prep (hoisted out of the per-call path).
    w1ti, b1r, w2p = gcn_prepare_params(w1, b1, w2)

    ref = gcn_reference(x, w1, b1, w2)

    # Default (auto) path at this size: single fused grid step.
    out = jax.block_until_ready(gcn_forward(x, w1ti, b1r, w2p))
    assert out.shape == (B, num_state, num_node)
    assert jnp.allclose(out, ref, atol=1e-5, rtol=1e-5), "fused path mismatch"

    # Also exercise the scaling path (grid over B, shared W2, parallel axis).
    out_b = jax.block_until_ready(gcn_forward(x, w1ti, b1r, w2p, batch_grid=True))
    assert jnp.allclose(out_b, ref, atol=1e-5, rtol=1e-5), "batched path mismatch"

    print("KERNEL_OK")
</pallas_src>

<mosaic_0001>
module attributes {stable_mosaic.version = 11 : i64} {
  func.func @_gcn_fused_kernel(%arg0: i32, %arg1: memref<64x16xf32, #tpu.memory_space<vmem>>, %arg2: memref<16x16xf32, #tpu.memory_space<vmem>>, %arg3: memref<1x16xf32, #tpu.memory_space<vmem>>, %arg4: memref<32x32xf32, #tpu.memory_space<vmem>>, %arg5: memref<64x16xf32, #tpu.memory_space<vmem>>) attributes {dimension_semantics = [#tpu.dimension_semantics<arbitrary>], iteration_bounds = array<i64: 1>, scalar_prefetch = 0 : i64, scratch_operands = 0 : i64, tpu.core_type = #tpu.core_type<tc>, window_params = [{pipeline_mode = #tpu.pipeline_mode<synchronous>, transform_indices = @transform_0, window_bounds = array<i64: 64, 16>}, {pipeline_mode = #tpu.pipeline_mode<synchronous>, transform_indices = @transform_1, window_bounds = array<i64: 16, 16>}, {pipeline_mode = #tpu.pipeline_mode<synchronous>, transform_indices = @transform_2, window_bounds = array<i64: 1, 16>}, {pipeline_mode = #tpu.pipeline_mode<synchronous>, transform_indices = @transform_3, window_bounds = array<i64: 32, 32>}, {pipeline_mode = #tpu.pipeline_mode<synchronous>, transform_indices = @transform_4, window_bounds = array<i64: 64, 16>}]} {
    %c0 = arith.constant 0 : index
    %c0_0 = arith.constant 0 : index
    %0 = vector.load %arg1[%c0, %c0_0] : memref<64x16xf32, #tpu.memory_space<vmem>>, vector<64x16xf32>
    %c0_1 = arith.constant 0 : index
    %c0_2 = arith.constant 0 : index
    %1 = vector.load %arg2[%c0_1, %c0_2] : memref<16x16xf32, #tpu.memory_space<vmem>>, vector<16x16xf32>
    %cst = arith.constant dense<0.000000e+00> : vector<64x16xf32>
    %2 = tpu.matmul %0, %1, %cst {dimension_numbers = #tpu.dot_dimension_numbers<[1], [0], [0], [1], [0, 0, 1, 1], [], []>} : vector<64x16xf32>, vector<16x16xf32>, vector<64x16xf32> -> vector<64x16xf32>
    %c0_3 = arith.constant 0 : index
    %c0_4 = arith.constant 0 : index
    %3 = vector.load %arg3[%c0_3, %c0_4] : memref<1x16xf32, #tpu.memory_space<vmem>>, vector<1x16xf32>
    %4 = vector.broadcast %3 : vector<1x16xf32> to vector<64x16xf32>
    %5 = arith.addf %2, %4 : vector<64x16xf32>
    %cst_5 = arith.constant 0.000000e+00 : f32
    %6 = vector.broadcast %cst_5 : f32 to vector<64x16xf32>
    %7 = arith.maximumf %5, %6 : vector<64x16xf32>
    %c0_6 = arith.constant 0 : index
    %c0_7 = arith.constant 0 : index
    %8 = vector.load %arg4[%c0_6, %c0_7] : memref<32x32xf32, #tpu.memory_space<vmem>>, vector<32x32xf32>
    %9 = vector.extract_strided_slice %7 {offsets = [0, 0], sizes = [32, 16], strides = [1, 1]} : vector<64x16xf32> to vector<32x16xf32>
    %cst_8 = arith.constant dense<0.000000e+00> : vector<32x16xf32>
    %10 = tpu.matmul %8, %9, %cst_8 {dimension_numbers = #tpu.dot_dimension_numbers<[1], [0], [0], [1], [0, 0, 1, 1], [], []>} : vector<32x32xf32>, vector<32x16xf32>, vector<32x16xf32> -> vector<32x16xf32>
    %c0_9 = arith.constant 0 : index
    %c0_10 = arith.constant 0 : index
    %11 = vector.load %arg5[%c0_9, %c0_10] : memref<64x16xf32, #tpu.memory_space<vmem>>, vector<32x16xf32>
    tpu.vector_store %arg5[%c0_9, %c0_10], %10 {strides = array<i32>} : memref<64x16xf32, #tpu.memory_space<vmem>>, vector<32x16xf32>,
    %12 = vector.extract_strided_slice %7 {offsets = [32, 0], sizes = [32, 16], strides = [1, 1]} : vector<64x16xf32> to vector<32x16xf32>
    %cst_11 = arith.constant dense<0.000000e+00> : vector<32x16xf32>
    %13 = tpu.matmul %8, %12, %cst_11 {dimension_numbers = #tpu.dot_dimension_numbers<[1], [0], [0], [1], [0, 0, 1, 1], [], []>} : vector<32x32xf32>, vector<32x16xf32>, vector<32x16xf32> -> vector<32x16xf32>
    %c32 = arith.constant 32 : index
    %c0_12 = arith.constant 0 : index
    %14 = vector.load %arg5[%c32, %c0_12] : memref<64x16xf32, #tpu.memory_space<vmem>>, vector<32x16xf32>
    tpu.vector_store %arg5[%c32, %c0_12], %13 {strides = array<i32>} : memref<64x16xf32, #tpu.memory_space<vmem>>, vector<32x16xf32>,
    return
  }
  func.func @transform_0(%arg0: i32) -> (i32, i32) {
    %c0_i32 = arith.constant 0 : i32
    %c0_i32_0 = arith.constant 0 : i32
    %c0_i32_1 = arith.constant 0 : i32
    return %c0_i32, %c0_i32_0 : i32, i32
  }
  func.func @transform_1(%arg0: i32) -> (i32, i32) {
    %c0_i32 = arith.constant 0 : i32
    %c0_i32_0 = arith.constant 0 : i32
    %c0_i32_1 = arith.constant 0 : i32
    return %c0_i32, %c0_i32_0 : i32, i32
  }
  func.func @transform_2(%arg0: i32) -> (i32, i32) {
    %c0_i32 = arith.constant 0 : i32
    %c0_i32_0 = arith.constant 0 : i32
    %c0_i32_1 = arith.constant 0 : i32
    return %c0_i32, %c0_i32_0 : i32, i32
  }
  func.func @transform_3(%arg0: i32) -> (i32, i32) {
    %c0_i32 = arith.constant 0 : i32
    %c0_i32_0 = arith.constant 0 : i32
    %c0_i32_1 = arith.constant 0 : i32
    return %c0_i32, %c0_i32_0 : i32, i32
  }
  func.func @transform_4(%arg0: i32) -> (i32, i32) {
    %c0_i32 = arith.constant 0 : i32
    %c0_i32_0 = arith.constant 0 : i32
    %c0_i32_1 = arith.constant 0 : i32
    return %c0_i32, %c0_i32_0 : i32, i32
  }
}

</mosaic_0001>

<llo_original>
// kernel: gcn_forward.1
$region0: #{gcn_forward.1}
  #allocation0 [shape = 'u32[]', space=smem, size = 0x4, offset = 0x4, fixed_abs, tag = 'smem constant byte address 0x4 - core index']
  #allocation1 [shape = 'u32[72,128]{1,0:T(1,128)}', space=vmem, size = 0x9000, scoped, tag = 'internal scratch']
  %s0 = inlined_call_operand.vmem [shape: f32[64,16], index: 0, kind: input, shape index: {}]
  %s1 = inlined_call_operand.vmem [shape: f32[16,16], index: 1, kind: input, shape index: {}]
  %s2 = inlined_call_operand.vmem [shape: f32[1,16], index: 2, kind: input, shape index: {}]
  %s3 = inlined_call_operand.vmem [shape: f32[32,32], index: 3, kind: input, shape index: {}]
  %s4 = inlined_call_operand.vmem [shape: f32[64,16], index: 4, kind: output, shape index: {}]
  %s5 = sld [smem:[#allocation0]]
  $region26: #{gcn_forward.1} parent=0
    _
  %s7 = ssub.s32 1, %s5
  %s8 = scalar_select 0, %s7, %s5
  // Predicated region
  $region2: #{gcn_forward.1} parent=0 // pred_check
    _
  $region3: #{gcn_forward.1} parent=0 // pred_check_branch
    %10 = sbr.rel (0) target = $region5
  $region4: #{gcn_forward.1} parent=0 // pred_region
    _
  $region5: #{gcn_forward.1} parent=0 // pred_fallthru
    _
  // Predicated region
  $region6: #{gcn_forward.1} parent=0 // pred_check
    _
  $region7: #{gcn_forward.1} parent=0 // pred_check_branch
    %12 = sbr.rel (0) target = $region9
  $region8: #{gcn_forward.1} parent=0 // pred_region
    _
  $region9: #{gcn_forward.1} parent=0 // pred_fallthru
    _
  // Predicated region
  $region10: #{gcn_forward.1} parent=0 // pred_check
    _
  $region11: #{gcn_forward.1} parent=0 // pred_check_branch
    %14 = sbr.rel (0) target = $region13
  $region12: #{gcn_forward.1} parent=0 // pred_region
    _
  $region13: #{gcn_forward.1} parent=0 // pred_fallthru
    _
  // Predicated region
  $region14: #{gcn_forward.1} parent=0 // pred_check
    _
  $region15: #{gcn_forward.1} parent=0 // pred_check_branch
    %16 = sbr.rel (0) target = $region17
  $region16: #{gcn_forward.1} parent=0 // pred_region
    _
  $region17: #{gcn_forward.1} parent=0 // pred_fallthru
    _
  %v17 = vld [vmem:[%s0] sm:$0xff]
  %v18 = vld [vmem:[%s0 + $0x8] sm:$0xff]
  %v19 = vld [vmem:[%s0 + $0x10] sm:$0xff]
  %v20 = vld [vmem:[%s0 + $0x18] sm:$0xff]
  %v21 = vld [vmem:[%s0 + $0x20] sm:$0xff]
  %v22 = vld [vmem:[%s0 + $0x28] sm:$0xff]
  %v23 = vld [vmem:[%s0 + $0x30] sm:$0xff]
  %v24 = vld [vmem:[%s0 + $0x38] sm:$0xff]
  %v25 = vld [vmem:[%s1] sm:$0xff]
  %v26 = vld [vmem:[%s1 + $0x8] sm:$0xff]
  %v27 = vld [vmem:[%s2] sm:$0x1]
  %v29 = vperm.slane %v27, 0
  %vm31 = vcmask 130048
  %v33 = vsel %vm31, %v17, 0
  %v36 = vsel %vm31, %v18, 0
  %v39 = vsel %vm31, %v19, 0
  %v42 = vsel %vm31, %v20, 0
  %v45 = vsel %vm31, %v21, 0
  %v48 = vsel %vm31, %v22, 0
  %v51 = vsel %vm31, %v23, 0
  %v54 = vsel %vm31, %v24, 0
  %56 = vmatpush.msra.mxu0 0.0
  %57 = vmatpush.msra.mxu0 0.0
  %58 = vmatpush.msra.mxu0 0.0
  %59 = vmatpush.msra.mxu0 0.0
  %60 = vmatpush.msra.mxu0 0.0
  %61 = vmatpush.msra.mxu0 0.0
  %62 = vmatpush.msra.mxu0 0.0
  %63 = vmatpush.msra.mxu0 0.0
  %64 = vmatpush.msra.mxu0 0.0
  %65 = vmatpush.msra.mxu0 0.0
  %66 = vmatpush.msra.mxu0 0.0
  %67 = vmatpush.msra.mxu0 0.0
  %68 = vmatpush.msra.mxu0 0.0
  %69 = vmatpush.msra.mxu0 0.0
  %70 = vmatpush.msra.mxu0 %v26
  %71 = vmatpush.msra.mxu0 %v25
  %72 = vmatmul.f32.gmra.mxu0 %v33
  %v73 = vpop.f32.mrf.mxu0
  %v74 = vadd.f32 %v29, %v73
  %75 = vmatmul.f32.gmra.mxu0 %v36
  %v76 = vpop.f32.mrf.mxu0
  %v77 = vadd.f32 %v29, %v76
  %78 = vmatmul.f32.gmra.mxu0 %v39
  %v79 = vpop.f32.mrf.mxu0
  %v80 = vadd.f32 %v29, %v79
  %81 = vmatmul.f32.gmra.mxu0 %v42
  %v82 = vpop.f32.mrf.mxu0
  %v83 = vadd.f32 %v29, %v82
  %84 = vmatmul.f32.gmra.mxu0 %v45
  %v85 = vpop.f32.mrf.mxu0
  %v86 = vadd.f32 %v29, %v85
  %87 = vmatmul.f32.gmra.mxu0 %v48
  %v88 = vpop.f32.mrf.mxu0
  %v89 = vadd.f32 %v29, %v88
  %90 = vmatmul.f32.gmra.mxu0 %v51
  %v91 = vpop.f32.mrf.mxu0
  %v92 = vadd.f32 %v29, %v91
  %93 = vmatmul.f32.gmra.mxu0 %v54
  %v94 = vpop.f32.mrf.mxu0
  %v95 = vadd.f32 %v29, %v94
  %96 = vdwg.mxu0
  %v97 = vmax.f32 %v74, 0.0
  %v98 = vmax.f32 %v77, 0.0
  %v99 = vmax.f32 %v80, 0.0
  %v100 = vmax.f32 %v83, 0.0
  %v101 = vmax.f32 %v86, 0.0
  %v102 = vmax.f32 %v89, 0.0
  %v103 = vmax.f32 %v92, 0.0
  %v104 = vmax.f32 %v95, 0.0
  %v105 = vld [vmem:[%s3] sm:$0xff]
  %v106 = vld [vmem:[%s3 + $0x8] sm:$0xff]
  %v107 = vld [vmem:[%s3 + $0x10] sm:$0xff]
  %v108 = vld [vmem:[%s3 + $0x18] sm:$0xff]
  %vm109 = vcmask 261120
  %v111 = vsel %vm109, %v105, 0
  %v114 = vsel %vm109, %v106, 0
  %v117 = vsel %vm109, %v107, 0
  %v120 = vsel %vm109, %v108, 0
  %122 = vmatpush.msra.mxu0 0.0
  %123 = vmatpush.msra.mxu0 0.0
  %124 = vmatpush.msra.mxu0 0.0
  %125 = vmatpush.msra.mxu0 0.0
  %126 = vmatpush.msra.mxu0 0.0
  %127 = vmatpush.msra.mxu0 0.0
  %128 = vmatpush.msra.mxu0 0.0
  %129 = vmatpush.msra.mxu0 0.0
  %130 = vmatpush.msra.mxu0 0.0
  %131 = vmatpush.msra.mxu0 0.0
  %132 = vmatpush.msra.mxu0 0.0
  %133 = vmatpush.msra.mxu0 0.0
  %134 = vmatpush.msra.mxu0 %v100
  %135 = vmatpush.msra.mxu0 %v99
  %136 = vmatpush.msra.mxu0 %v98
  %137 = vmatpush.msra.mxu0 %v97
  %138 = vmatmul.f32.gmra.mxu0 %v111
  %v139 = vpop.f32.mrf.mxu0
  %v140 = vadd.f32 0.0, %v139
  %141 = vmatmul.f32.gmra.mxu0 %v114
  %v142 = vpop.f32.mrf.mxu0
  %v143 = vadd.f32 0.0, %v142
  %144 = vmatmul.f32.gmra.mxu0 %v117
  %v145 = vpop.f32.mrf.mxu0
  %v146 = vadd.f32 0.0, %v145
  %147 = vmatmul.f32.gmra.mxu0 %v120
  %v148 = vpop.f32.mrf.mxu0
  %v149 = vadd.f32 0.0, %v148
  %150 = vdwg.mxu0
  %151 = vst.msk [vmem:[%s4] sm:$0xff] %vm31, %v140
  %152 = vst.msk [vmem:[%s4 + $0x8] sm:$0xff] %vm31, %v143
  %153 = vst.msk [vmem:[%s4 + $0x10] sm:$0xff] %vm31, %v146
  %154 = vst.msk [vmem:[%s4 + $0x18] sm:$0xff] %vm31, %v149
  %155 = vmatpush.msra.mxu0 0.0
  %156 = vmatpush.msra.mxu0 0.0
  %157 = vmatpush.msra.mxu0 0.0
  %158 = vmatpush.msra.mxu0 0.0
  %159 = vmatpush.msra.mxu0 0.0
  %160 = vmatpush.msra.mxu0 0.0
  %161 = vmatpush.msra.mxu0 0.0
  %162 = vmatpush.msra.mxu0 0.0
  %163 = vmatpush.msra.mxu0 0.0
  %164 = vmatpush.msra.mxu0 0.0
  %165 = vmatpush.msra.mxu0 0.0
  %166 = vmatpush.msra.mxu0 0.0
  %167 = vmatpush.msra.mxu0 %v104
  %168 = vmatpush.msra.mxu0 %v103
  %169 = vmatpush.msra.mxu0 %v102
  %170 = vmatpush.msra.mxu0 %v101
  %171 = vmatmul.f32.gmra.mxu0 %v111
  %v172 = vpop.f32.mrf.mxu0
  %v173 = vadd.f32 0.0, %v172
  %174 = vmatmul.f32.gmra.mxu0 %v114
  %v175 = vpop.f32.mrf.mxu0
  %v176 = vadd.f32 0.0, %v175
  %177 = vmatmul.f32.gmra.mxu0 %v117
  %v178 = vpop.f32.mrf.mxu0
  %v179 = vadd.f32 0.0, %v178
  %180 = vmatmul.f32.gmra.mxu0 %v120
  %v181 = vpop.f32.mrf.mxu0
  %v182 = vadd.f32 0.0, %v181
  %183 = vdwg.mxu0
  %184 = vst.msk [vmem:[%s4 + $0x20] sm:$0xff] %vm31, %v173
  %185 = vst.msk [vmem:[%s4 + $0x28] sm:$0xff] %vm31, %v176
  %186 = vst.msk [vmem:[%s4 + $0x30] sm:$0xff] %vm31, %v179
  %187 = vst.msk [vmem:[%s4 + $0x38] sm:$0xff] %vm31, %v182
  // Predicated region
  $region18: #{gcn_forward.1} parent=0 // pred_check
    _
  $region19: #{gcn_forward.1} parent=0 // pred_check_branch
    %189 = sbr.rel (0) target = $region21
  $region20: #{gcn_forward.1} parent=0 // pred_region
    _
  $region21: #{gcn_forward.1} parent=0 // pred_fallthru
    _
  // Predicated region
  $region22: #{gcn_forward.1} parent=0 // pred_check
    _
  $region23: #{gcn_forward.1} parent=0 // pred_check_branch
    %191 = sbr.rel (0) target = $region25
  $region24: #{gcn_forward.1} parent=0 // pred_region
    _
  $region25: #{gcn_forward.1} parent=0 // pred_fallthru
    _

</llo_original>
